<compile_context>
chip_gen: v7x
topology: tpu7x:2x2x1
jax: 0.10.0
libtpu: 0.0.40
codegen_flags: <defaults>
</compile_context>

<pallas_src>
import numpy as np
import jax
import jax.numpy as jnp
from jax.experimental import pallas as pl
from jax.experimental.pallas import tpu as pltpu

KH, KW, OC = 4, 4, 4


def _pick_batch_tile(n, hwp, lc, lp, budget_bytes=16 << 20, hard_cap=256):
    """Batch tile: single step when the whole batch fits the VMEM budget, else the largest
    divisor of n within the budget (preferring multiples of 8 for sublane occupancy).
    hard_cap bounds per-value vreg/spill pressure (accumulators are (Bt, Lc) values)."""
    per_image = 4 * (hwp + 2 * OC * lc + OC * lp)        # f32 block bytes per image
    cap = max(1, int(budget_bytes // (2 * per_image)))   # x2: double-buffered pipeline
    cap = min(cap, hard_cap)
    if n <= cap:
        return n                                         # one grid step: no per-step overhead
    divs = [d for d in range(1, cap + 1) if n % d == 0]
    best = max(divs)
    div8 = [d for d in divs if d % 8 == 0]
    if div8 and 2 * max(div8) >= best:
        return max(div8)
    return best


def _pool_from_relu(relu, W, Lp):
    # MaxPool 2x2/2 = elementwise max of the four window-corner shifts of the relu map.
    # Static slices of the in-register value (no re-load of relu_ref); the stride-2
    # subsample is deferred to the wrapper (pure layout plumbing).
    r00 = relu[:, 0:Lp]
    r01 = relu[:, 1:1 + Lp]
    r10 = relu[:, W:W + Lp]
    r11 = relu[:, W + 1:W + 1 + Lp]
    return jnp.maximum(jnp.maximum(r00, r01), jnp.maximum(r10, r11))


def _make_specialized_kernel(W, Lc, Lp, w_np):
    """Weights baked as Python constants; exploits +/-1 entries and channel negation pairs."""
    w_flat = np.asarray(w_np, dtype=np.float64).reshape(OC, KH * KW)
    conv_offsets = [kh * W + kw for kh in range(KH) for kw in range(KW)]

    # Channels that are exact negations of an earlier (base) channel reuse its accumulator.
    neg_of = [None] * OC
    for co in range(OC):
        for cp in range(co):
            if neg_of[cp] is None and np.array_equal(w_flat[co], -w_flat[cp]):
                neg_of[co] = cp
                break
    base = [co for co in range(OC) if neg_of[co] is None]

    def kernel(x_ref, conv_ref, relu_ref, pool_ref):
        accs = {co: None for co in base}
        for k, off in enumerate(conv_offsets):
            if all(w_flat[co, k] == 0.0 for co in base):
                continue
            xk = x_ref[:, 0, pl.ds(off, Lc)]              # (Bt, Lc) contiguous lane-dense load
            for co in base:
                w = float(w_flat[co, k])
                if w == 0.0:
                    continue
                if accs[co] is None:
                    accs[co] = xk if w == 1.0 else (-xk if w == -1.0 else xk * w)
                elif w == 1.0:
                    accs[co] = accs[co] + xk              # pure add (no multiply)
                elif w == -1.0:
                    accs[co] = accs[co] - xk              # pure sub (no multiply)
                else:
                    accs[co] = accs[co] + xk * w

        for co in base:
            if accs[co] is None:                          # all-zero filter (not hit here)
                accs[co] = jnp.zeros((x_ref.shape[0], Lc), jnp.float32)

        for co in range(OC):
            acc = accs[co] if neg_of[co] is None else -accs[neg_of[co]]
            conv_ref[:, co, :] = acc                      # conv output (no bias)
            relu = jnp.maximum(acc, 0.0)
            relu_ref[:, co, :] = relu                     # relu output
            pool_ref[:, co, :] = _pool_from_relu(relu, W, Lp)

    return kernel


def _make_generic_kernel(W, Lc, Lp):
    """Fallback for traced / arbitrary weights: scalar weights from SMEM."""
    conv_offsets = [kh * W + kw for kh in range(KH) for kw in range(KW)]

    def kernel(w_ref, x_ref, conv_ref, relu_ref, pool_ref):
        accs = [None] * OC
        for k, off in enumerate(conv_offsets):
            xk = x_ref[:, 0, pl.ds(off, Lc)]
            for co in range(OC):
                term = xk * w_ref[co, k]
                accs[co] = term if accs[co] is None else accs[co] + term
        for co in range(OC):
            acc = accs[co]
            conv_ref[:, co, :] = acc
            relu = jnp.maximum(acc, 0.0)
            relu_ref[:, co, :] = relu
            pool_ref[:, co, :] = _pool_from_relu(relu, W, Lp)

    return kernel


def net_forward(x, weight):
    N, C, H, W = x.shape
    assert C == 1 and weight.shape == (OC, 1, KH, KW)
    Ho, Wo = H - KH + 1, W - KW + 1            # valid conv output
    Hp, Wp = Ho // 2, Wo // 2                  # maxpool(2,2) output
    assert Ho >= 2 and Wo >= 2 and Hp >= 1 and Wp >= 1, "degenerate spatial size"

    Lc = Ho * W                                # flat wide conv/relu row length per channel
    Lp = 2 * (Hp - 1) * W + 2 * (Wp - 1) + 1   # flat row covering all 2x2 window maxima
    assert (W + 1) + Lp <= Lc                  # shifted pool slices stay in bounds

    HWp = H * W + KW - 1
    Bt = _pick_batch_tile(N, HWp, Lc, Lp)
    grid = (N // Bt,)

    # Flat lane-dense input; KW-1 trailing zeros keep every window slice of length Lc in bounds.
    x_flat = jnp.pad(x.reshape(N, 1, H * W).astype(jnp.float32),
                     ((0, 0), (0, 0), (0, KW - 1)))

    # Specialize on concrete weights (the module's fixed filter bank); fall back if traced.
    try:
        w_np = np.asarray(weight, dtype=np.float32)
    except Exception:
        w_np = None

    out_shape = (
        jax.ShapeDtypeStruct((N, OC, Lc), jnp.float32),   # conv  (flat wide rows)
        jax.ShapeDtypeStruct((N, OC, Lc), jnp.float32),   # relu  (flat wide rows)
        jax.ShapeDtypeStruct((N, OC, Lp), jnp.float32),   # 2x2 window maxima (flat wide rows)
    )
    out_specs = (
        pl.BlockSpec((Bt, OC, Lc), lambda n: (n, 0, 0)),
        pl.BlockSpec((Bt, OC, Lc), lambda n: (n, 0, 0)),
        pl.BlockSpec((Bt, OC, Lp), lambda n: (n, 0, 0)),
    )
    cparams = pltpu.CompilerParams(dimension_semantics=("parallel",),
                                   vmem_limit_bytes=32 * 1024 * 1024)

    if w_np is not None:
        kernel = _make_specialized_kernel(W, Lc, Lp, w_np)
        conv_w, relu_w, pool_w = pl.pallas_call(
            kernel,
            out_shape=out_shape,
            grid=grid,
            in_specs=[pl.BlockSpec((Bt, 1, HWp), lambda n: (n, 0, 0))],
            out_specs=out_specs,
            compiler_params=cparams,
        )(x_flat)
    else:
        kernel = _make_generic_kernel(W, Lc, Lp)
        w_flat = weight.reshape(OC, KH * KW).astype(jnp.float32)
        conv_w, relu_w, pool_w = pl.pallas_call(
            kernel,
            out_shape=out_shape,
            grid=grid,
            in_specs=[pl.BlockSpec(memory_space=pltpu.MemorySpace.SMEM),
                      pl.BlockSpec((Bt, 1, HWp), lambda n: (n, 0, 0))],
            out_specs=out_specs,
            compiler_params=cparams,
        )(w_flat, x_flat)

    # Wrapper-side layout plumbing back to NCHW (cheap slices/reshapes, no gather).
    conv = conv_w.reshape(N, OC, Ho, W)[..., :Wo]
    relu = relu_w.reshape(N, OC, Ho, W)[..., :Wo]
    pad_to = 2 * Hp * W
    pool_pad = jnp.pad(pool_w, ((0, 0), (0, 0), (0, pad_to - Lp)))
    pool = pool_pad.reshape(N, OC, Hp, 2, W)[:, :, :, 0, 0:2 * Wp:2]
    return conv, relu, pool


def reference(x, weight):
    conv = jax.lax.conv_general_dilated(
        x, weight, window_strides=(1, 1), padding="VALID",
        dimension_numbers=("NCHW", "OIHW", "NCHW"),
        precision=jax.lax.Precision.HIGHEST)
    relu = jnp.maximum(conv, 0.0)
    pooled = jax.lax.reduce_window(
        relu, -jnp.inf, jax.lax.max,
        window_dimensions=(1, 1, 2, 2), window_strides=(1, 1, 2, 2), padding="VALID")
    return conv, relu, pooled


if __name__ == "__main__":
    # Deterministic parameter init — the fixed filter bank from the PyTorch script.
    filter_vals = np.array([[-1, -1, 1, 1],
                            [-1, -1, 1, 1],
                            [-1, -1, 1, 1],
                            [-1, -1, 1, 1]], dtype=np.float32)
    f1 = filter_vals
    f2 = -f1
    f3 = f1.T
    f4 = -f3
    weight = jnp.asarray(np.stack([f1, f2, f3, f4])[:, None, :, :], dtype=jnp.float32)  # (4,1,4,4)

    key = jax.random.PRNGKey(0)
    x = jax.random.normal(key, (2, 1, 16, 16), dtype=jnp.float32)   # NCHW, single channel

    conv_x, activated_x, pooled_x = net_forward(x, weight)
    jax.block_until_ready((conv_x, activated_x, pooled_x))

    ref_conv, ref_act, ref_pool = reference(x, weight)
    np.testing.assert_allclose(np.asarray(conv_x), np.asarray(ref_conv), rtol=1e-5, atol=1e-5)
    np.testing.assert_allclose(np.asarray(activated_x), np.asarray(ref_act), rtol=1e-5, atol=1e-5)
    np.testing.assert_allclose(np.asarray(pooled_x), np.asarray(ref_pool), rtol=1e-5, atol=1e-5)

    print("KERNEL_OK")
</pallas_src>

<mosaic_0001>
module attributes {stable_mosaic.version = 11 : i64} {
  func.func @kernel(%arg0: i32, %arg1: memref<2x1x259xf32, #tpu.memory_space<vmem>>, %arg2: memref<2x4x208xf32, #tpu.memory_space<vmem>>, %arg3: memref<2x4x208xf32, #tpu.memory_space<vmem>>, %arg4: memref<2x4x171xf32, #tpu.memory_space<vmem>>) attributes {dimension_semantics = [#tpu.dimension_semantics<parallel>], iteration_bounds = array<i64: 1>, scalar_prefetch = 0 : i64, scratch_operands = 0 : i64, tpu.core_type = #tpu.core_type<tc>, window_params = [{transform_indices = @transform_0, window_bounds = array<i64: 2, 1, 259>}, {transform_indices = @transform_1, window_bounds = array<i64: 2, 4, 208>}, {transform_indices = @transform_2, window_bounds = array<i64: 2, 4, 208>}, {transform_indices = @transform_3, window_bounds = array<i64: 2, 4, 171>}]} {
    %c0 = arith.constant 0 : index
    %c0_0 = arith.constant 0 : index
    %c0_1 = arith.constant 0 : index
    %0 = vector.load %arg1[%c0, %c0_0, %c0_1] : memref<2x1x259xf32, #tpu.memory_space<vmem>>, vector<2x1x208xf32>
    %1 = vector.shape_cast %0 : vector<2x1x208xf32> to vector<2x208xf32>
    %cst = arith.constant 0.000000e+00 : f32
    %2 = vector.broadcast %cst : f32 to vector<2x208xf32>
    %3 = arith.subf %2, %1 : vector<2x208xf32>
    %cst_2 = arith.constant 0.000000e+00 : f32
    %4 = vector.broadcast %cst_2 : f32 to vector<2x208xf32>
    %5 = arith.subf %4, %1 : vector<2x208xf32>
    %c0_3 = arith.constant 0 : index
    %c0_4 = arith.constant 0 : index
    %c1 = arith.constant 1 : index
    %6 = vector.load %arg1[%c0_3, %c0_4, %c1] : memref<2x1x259xf32, #tpu.memory_space<vmem>>, vector<2x1x208xf32>
    %7 = vector.shape_cast %6 : vector<2x1x208xf32> to vector<2x208xf32>
    %8 = arith.subf %3, %7 : vector<2x208xf32>
    %9 = arith.subf %5, %7 : vector<2x208xf32>
    %c0_5 = arith.constant 0 : index
    %c0_6 = arith.constant 0 : index
    %c2 = arith.constant 2 : index
    %10 = vector.load %arg1[%c0_5, %c0_6, %c2] : memref<2x1x259xf32, #tpu.memory_space<vmem>>, vector<2x1x208xf32>
    %11 = vector.shape_cast %10 : vector<2x1x208xf32> to vector<2x208xf32>
    %12 = arith.addf %8, %11 : vector<2x208xf32>
    %13 = arith.subf %9, %11 : vector<2x208xf32>
    %c0_7 = arith.constant 0 : index
    %c0_8 = arith.constant 0 : index
    %c3 = arith.constant 3 : index
    %14 = vector.load %arg1[%c0_7, %c0_8, %c3] : memref<2x1x259xf32, #tpu.memory_space<vmem>>, vector<2x1x208xf32>
    %15 = vector.shape_cast %14 : vector<2x1x208xf32> to vector<2x208xf32>
    %16 = arith.addf %12, %15 : vector<2x208xf32>
    %17 = arith.subf %13, %15 : vector<2x208xf32>
    %c0_9 = arith.constant 0 : index
    %c0_10 = arith.constant 0 : index
    %c16 = arith.constant 16 : index
    %18 = vector.load %arg1[%c0_9, %c0_10, %c16] : memref<2x1x259xf32, #tpu.memory_space<vmem>>, vector<2x1x208xf32>
    %19 = vector.shape_cast %18 : vector<2x1x208xf32> to vector<2x208xf32>
    %20 = arith.subf %16, %19 : vector<2x208xf32>
    %21 = arith.subf %17, %19 : vector<2x208xf32>
    %c0_11 = arith.constant 0 : index
    %c0_12 = arith.constant 0 : index
    %c17 = arith.constant 17 : index
    %22 = vector.load %arg1[%c0_11, %c0_12, %c17] : memref<2x1x259xf32, #tpu.memory_space<vmem>>, vector<2x1x208xf32>
    %23 = vector.shape_cast %22 : vector<2x1x208xf32> to vector<2x208xf32>
    %24 = arith.subf %20, %23 : vector<2x208xf32>
    %25 = arith.subf %21, %23 : vector<2x208xf32>
    %c0_13 = arith.constant 0 : index
    %c0_14 = arith.constant 0 : index
    %c18 = arith.constant 18 : index
    %26 = vector.load %arg1[%c0_13, %c0_14, %c18] : memref<2x1x259xf32, #tpu.memory_space<vmem>>, vector<2x1x208xf32>
    %27 = vector.shape_cast %26 : vector<2x1x208xf32> to vector<2x208xf32>
    %28 = arith.addf %24, %27 : vector<2x208xf32>
    %29 = arith.subf %25, %27 : vector<2x208xf32>
    %c0_15 = arith.constant 0 : index
    %c0_16 = arith.constant 0 : index
    %c19 = arith.constant 19 : index
    %30 = vector.load %arg1[%c0_15, %c0_16, %c19] : memref<2x1x259xf32, #tpu.memory_space<vmem>>, vector<2x1x208xf32>
    %31 = vector.shape_cast %30 : vector<2x1x208xf32> to vector<2x208xf32>
    %32 = arith.addf %28, %31 : vector<2x208xf32>
    %33 = arith.subf %29, %31 : vector<2x208xf32>
    %c0_17 = arith.constant 0 : index
    %c0_18 = arith.constant 0 : index
    %c32 = arith.constant 32 : index
    %34 = vector.load %arg1[%c0_17, %c0_18, %c32] : memref<2x1x259xf32, #tpu.memory_space<vmem>>, vector<2x1x208xf32>
    %35 = vector.shape_cast %34 : vector<2x1x208xf32> to vector<2x208xf32>
    %36 = arith.subf %32, %35 : vector<2x208xf32>
    %37 = arith.addf %33, %35 : vector<2x208xf32>
    %c0_19 = arith.constant 0 : index
    %c0_20 = arith.constant 0 : index
    %c33 = arith.constant 33 : index
    %38 = vector.load %arg1[%c0_19, %c0_20, %c33] : memref<2x1x259xf32, #tpu.memory_space<vmem>>, vector<2x1x208xf32>
    %39 = vector.shape_cast %38 : vector<2x1x208xf32> to vector<2x208xf32>
    %40 = arith.subf %36, %39 : vector<2x208xf32>
    %41 = arith.addf %37, %39 : vector<2x208xf32>
    %c0_21 = arith.constant 0 : index
    %c0_22 = arith.constant 0 : index
    %c34 = arith.constant 34 : index
    %42 = vector.load %arg1[%c0_21, %c0_22, %c34] : memref<2x1x259xf32, #tpu.memory_space<vmem>>, vector<2x1x208xf32>
    %43 = vector.shape_cast %42 : vector<2x1x208xf32> to vector<2x208xf32>
    %44 = arith.addf %40, %43 : vector<2x208xf32>
    %45 = arith.addf %41, %43 : vector<2x208xf32>
    %c0_23 = arith.constant 0 : index
    %c0_24 = arith.constant 0 : index
    %c35 = arith.constant 35 : index
    %46 = vector.load %arg1[%c0_23, %c0_24, %c35] : memref<2x1x259xf32, #tpu.memory_space<vmem>>, vector<2x1x208xf32>
    %47 = vector.shape_cast %46 : vector<2x1x208xf32> to vector<2x208xf32>
    %48 = arith.addf %44, %47 : vector<2x208xf32>
    %49 = arith.addf %45, %47 : vector<2x208xf32>
    %c0_25 = arith.constant 0 : index
    %c0_26 = arith.constant 0 : index
    %c48 = arith.constant 48 : index
    %50 = vector.load %arg1[%c0_25, %c0_26, %c48] : memref<2x1x259xf32, #tpu.memory_space<vmem>>, vector<2x1x208xf32>
    %51 = vector.shape_cast %50 : vector<2x1x208xf32> to vector<2x208xf32>
    %52 = arith.subf %48, %51 : vector<2x208xf32>
    %53 = arith.addf %49, %51 : vector<2x208xf32>
    %c0_27 = arith.constant 0 : index
    %c0_28 = arith.constant 0 : index
    %c49 = arith.constant 49 : index
    %54 = vector.load %arg1[%c0_27, %c0_28, %c49] : memref<2x1x259xf32, #tpu.memory_space<vmem>>, vector<2x1x208xf32>
    %55 = vector.shape_cast %54 : vector<2x1x208xf32> to vector<2x208xf32>
    %56 = arith.subf %52, %55 : vector<2x208xf32>
    %57 = arith.addf %53, %55 : vector<2x208xf32>
    %c0_29 = arith.constant 0 : index
    %c0_30 = arith.constant 0 : index
    %c50 = arith.constant 50 : index
    %58 = vector.load %arg1[%c0_29, %c0_30, %c50] : memref<2x1x259xf32, #tpu.memory_space<vmem>>, vector<2x1x208xf32>
    %59 = vector.shape_cast %58 : vector<2x1x208xf32> to vector<2x208xf32>
    %60 = arith.addf %56, %59 : vector<2x208xf32>
    %61 = arith.addf %57, %59 : vector<2x208xf32>
    %c0_31 = arith.constant 0 : index
    %c0_32 = arith.constant 0 : index
    %c51 = arith.constant 51 : index
    %62 = vector.load %arg1[%c0_31, %c0_32, %c51] : memref<2x1x259xf32, #tpu.memory_space<vmem>>, vector<2x1x208xf32>
    %63 = vector.shape_cast %62 : vector<2x1x208xf32> to vector<2x208xf32>
    %64 = arith.addf %60, %63 : vector<2x208xf32>
    %65 = arith.addf %61, %63 : vector<2x208xf32>
    %c0_33 = arith.constant 0 : index
    %c0_34 = arith.constant 0 : index
    %c0_35 = arith.constant 0 : index
    %66 = vector.load %arg2[%c0_33, %c0_34, %c0_35] : memref<2x4x208xf32, #tpu.memory_space<vmem>>, vector<2x1x208xf32>
    %67 = vector.shape_cast %66 : vector<2x1x208xf32> to vector<2x208xf32>
    %68 = vector.shape_cast %64 : vector<2x208xf32> to vector<2x1x208xf32>
    tpu.vector_store %arg2[%c0_33, %c0_34, %c0_35], %68 {strides = array<i32>} : memref<2x4x208xf32, #tpu.memory_space<vmem>>, vector<2x1x208xf32>,
    %cst_36 = arith.constant 0.000000e+00 : f32
    %69 = vector.broadcast %cst_36 : f32 to vector<2x208xf32>
    %70 = arith.maximumf %64, %69 : vector<2x208xf32>
    %c0_37 = arith.constant 0 : index
    %c0_38 = arith.constant 0 : index
    %c0_39 = arith.constant 0 : index
    %71 = vector.load %arg3[%c0_37, %c0_38, %c0_39] : memref<2x4x208xf32, #tpu.memory_space<vmem>>, vector<2x1x208xf32>
    %72 = vector.shape_cast %71 : vector<2x1x208xf32> to vector<2x208xf32>
    %73 = vector.shape_cast %70 : vector<2x208xf32> to vector<2x1x208xf32>
    tpu.vector_store %arg3[%c0_37, %c0_38, %c0_39], %73 {strides = array<i32>} : memref<2x4x208xf32, #tpu.memory_space<vmem>>, vector<2x1x208xf32>,
    %74 = vector.extract_strided_slice %70 {offsets = [0, 0], sizes = [2, 171], strides = [1, 1]} : vector<2x208xf32> to vector<2x171xf32>
    %75 = vector.extract_strided_slice %70 {offsets = [0, 1], sizes = [2, 171], strides = [1, 1]} : vector<2x208xf32> to vector<2x171xf32>
    %76 = vector.extract_strided_slice %70 {offsets = [0, 16], sizes = [2, 171], strides = [1, 1]} : vector<2x208xf32> to vector<2x171xf32>
    %77 = vector.extract_strided_slice %70 {offsets = [0, 17], sizes = [2, 171], strides = [1, 1]} : vector<2x208xf32> to vector<2x171xf32>
    %78 = arith.maximumf %74, %75 : vector<2x171xf32>
    %79 = arith.maximumf %76, %77 : vector<2x171xf32>
    %80 = arith.maximumf %78, %79 : vector<2x171xf32>
    %c0_40 = arith.constant 0 : index
    %c0_41 = arith.constant 0 : index
    %c0_42 = arith.constant 0 : index
    %81 = vector.load %arg4[%c0_40, %c0_41, %c0_42] : memref<2x4x171xf32, #tpu.memory_space<vmem>>, vector<2x1x171xf32>
    %82 = vector.shape_cast %81 : vector<2x1x171xf32> to vector<2x171xf32>
    %83 = vector.shape_cast %80 : vector<2x171xf32> to vector<2x1x171xf32>
    tpu.vector_store %arg4[%c0_40, %c0_41, %c0_42], %83 {strides = array<i32>} : memref<2x4x171xf32, #tpu.memory_space<vmem>>, vector<2x1x171xf32>,
    %cst_43 = arith.constant 0.000000e+00 : f32
    %84 = vector.broadcast %cst_43 : f32 to vector<2x208xf32>
    %85 = arith.subf %84, %64 : vector<2x208xf32>
    %c0_44 = arith.constant 0 : index
    %c1_45 = arith.constant 1 : index
    %c0_46 = arith.constant 0 : index
    %86 = vector.load %arg2[%c0_44, %c1_45, %c0_46] : memref<2x4x208xf32, #tpu.memory_space<vmem>>, vector<2x1x208xf32>
    %87 = vector.shape_cast %86 : vector<2x1x208xf32> to vector<2x208xf32>
    %88 = vector.shape_cast %85 : vector<2x208xf32> to vector<2x1x208xf32>
    tpu.vector_store %arg2[%c0_44, %c1_45, %c0_46], %88 {strides = array<i32>} : memref<2x4x208xf32, #tpu.memory_space<vmem>>, vector<2x1x208xf32>,
    %cst_47 = arith.constant 0.000000e+00 : f32
    %89 = vector.broadcast %cst_47 : f32 to vector<2x208xf32>
    %90 = arith.maximumf %85, %89 : vector<2x208xf32>
    %c0_48 = arith.constant 0 : index
    %c1_49 = arith.constant 1 : index
    %c0_50 = arith.constant 0 : index
    %91 = vector.load %arg3[%c0_48, %c1_49, %c0_50] : memref<2x4x208xf32, #tpu.memory_space<vmem>>, vector<2x1x208xf32>
    %92 = vector.shape_cast %91 : vector<2x1x208xf32> to vector<2x208xf32>
    %93 = vector.shape_cast %90 : vector<2x208xf32> to vector<2x1x208xf32>
    tpu.vector_store %arg3[%c0_48, %c1_49, %c0_50], %93 {strides = array<i32>} : memref<2x4x208xf32, #tpu.memory_space<vmem>>, vector<2x1x208xf32>,
    %94 = vector.extract_strided_slice %90 {offsets = [0, 0], sizes = [2, 171], strides = [1, 1]} : vector<2x208xf32> to vector<2x171xf32>
    %95 = vector.extract_strided_slice %90 {offsets = [0, 1], sizes = [2, 171], strides = [1, 1]} : vector<2x208xf32> to vector<2x171xf32>
    %96 = vector.extract_strided_slice %90 {offsets = [0, 16], sizes = [2, 171], strides = [1, 1]} : vector<2x208xf32> to vector<2x171xf32>
    %97 = vector.extract_strided_slice %90 {offsets = [0, 17], sizes = [2, 171], strides = [1, 1]} : vector<2x208xf32> to vector<2x171xf32>
    %98 = arith.maximumf %94, %95 : vector<2x171xf32>
    %99 = arith.maximumf %96, %97 : vector<2x171xf32>
    %100 = arith.maximumf %98, %99 : vector<2x171xf32>
    %c0_51 = arith.constant 0 : index
    %c1_52 = arith.constant 1 : index
    %c0_53 = arith.constant 0 : index
    %101 = vector.load %arg4[%c0_51, %c1_52, %c0_53] : memref<2x4x171xf32, #tpu.memory_space<vmem>>, vector<2x1x171xf32>
    %102 = vector.shape_cast %101 : vector<2x1x171xf32> to vector<2x171xf32>
    %103 = vector.shape_cast %100 : vector<2x171xf32> to vector<2x1x171xf32>
    tpu.vector_store %arg4[%c0_51, %c1_52, %c0_53], %103 {strides = array<i32>} : memref<2x4x171xf32, #tpu.memory_space<vmem>>, vector<2x1x171xf32>,
    %c0_54 = arith.constant 0 : index
    %c2_55 = arith.constant 2 : index
    %c0_56 = arith.constant 0 : index
    %104 = vector.load %arg2[%c0_54, %c2_55, %c0_56] : memref<2x4x208xf32, #tpu.memory_space<vmem>>, vector<2x1x208xf32>
    %105 = vector.shape_cast %104 : vector<2x1x208xf32> to vector<2x208xf32>
    %106 = vector.shape_cast %65 : vector<2x208xf32> to vector<2x1x208xf32>
    tpu.vector_store %arg2[%c0_54, %c2_55, %c0_56], %106 {strides = array<i32>} : memref<2x4x208xf32, #tpu.memory_space<vmem>>, vector<2x1x208xf32>,
    %cst_57 = arith.constant 0.000000e+00 : f32
    %107 = vector.broadcast %cst_57 : f32 to vector<2x208xf32>
    %108 = arith.maximumf %65, %107 : vector<2x208xf32>
    %c0_58 = arith.constant 0 : index
    %c2_59 = arith.constant 2 : index
    %c0_60 = arith.constant 0 : index
    %109 = vector.load %arg3[%c0_58, %c2_59, %c0_60] : memref<2x4x208xf32, #tpu.memory_space<vmem>>, vector<2x1x208xf32>
    %110 = vector.shape_cast %109 : vector<2x1x208xf32> to vector<2x208xf32>
    %111 = vector.shape_cast %108 : vector<2x208xf32> to vector<2x1x208xf32>
    tpu.vector_store %arg3[%c0_58, %c2_59, %c0_60], %111 {strides = array<i32>} : memref<2x4x208xf32, #tpu.memory_space<vmem>>, vector<2x1x208xf32>,
    %112 = vector.extract_strided_slice %108 {offsets = [0, 0], sizes = [2, 171], strides = [1, 1]} : vector<2x208xf32> to vector<2x171xf32>
    %113 = vector.extract_strided_slice %108 {offsets = [0, 1], sizes = [2, 171], strides = [1, 1]} : vector<2x208xf32> to vector<2x171xf32>
    %114 = vector.extract_strided_slice %108 {offsets = [0, 16], sizes = [2, 171], strides = [1, 1]} : vector<2x208xf32> to vector<2x171xf32>
    %115 = vector.extract_strided_slice %108 {offsets = [0, 17], sizes = [2, 171], strides = [1, 1]} : vector<2x208xf32> to vector<2x171xf32>
    %116 = arith.maximumf %112, %113 : vector<2x171xf32>
    %117 = arith.maximumf %114, %115 : vector<2x171xf32>
    %118 = arith.maximumf %116, %117 : vector<2x171xf32>
    %c0_61 = arith.constant 0 : index
    %c2_62 = arith.constant 2 : index
    %c0_63 = arith.constant 0 : index
    %119 = vector.load %arg4[%c0_61, %c2_62, %c0_63] : memref<2x4x171xf32, #tpu.memory_space<vmem>>, vector<2x1x171xf32>
    %120 = vector.shape_cast %119 : vector<2x1x171xf32> to vector<2x171xf32>
    %121 = vector.shape_cast %118 : vector<2x171xf32> to vector<2x1x171xf32>
    tpu.vector_store %arg4[%c0_61, %c2_62, %c0_63], %121 {strides = array<i32>} : memref<2x4x171xf32, #tpu.memory_space<vmem>>, vector<2x1x171xf32>,
    %cst_64 = arith.constant 0.000000e+00 : f32
    %122 = vector.broadcast %cst_64 : f32 to vector<2x208xf32>
    %123 = arith.subf %122, %65 : vector<2x208xf32>
    %c0_65 = arith.constant 0 : index
    %c3_66 = arith.constant 3 : index
    %c0_67 = arith.constant 0 : index
    %124 = vector.load %arg2[%c0_65, %c3_66, %c0_67] : memref<2x4x208xf32, #tpu.memory_space<vmem>>, vector<2x1x208xf32>
    %125 = vector.shape_cast %124 : vector<2x1x208xf32> to vector<2x208xf32>
    %126 = vector.shape_cast %123 : vector<2x208xf32> to vector<2x1x208xf32>
    tpu.vector_store %arg2[%c0_65, %c3_66, %c0_67], %126 {strides = array<i32>} : memref<2x4x208xf32, #tpu.memory_space<vmem>>, vector<2x1x208xf32>,
    %cst_68 = arith.constant 0.000000e+00 : f32
    %127 = vector.broadcast %cst_68 : f32 to vector<2x208xf32>
    %128 = arith.maximumf %123, %127 : vector<2x208xf32>
    %c0_69 = arith.constant 0 : index
    %c3_70 = arith.constant 3 : index
    %c0_71 = arith.constant 0 : index
    %129 = vector.load %arg3[%c0_69, %c3_70, %c0_71] : memref<2x4x208xf32, #tpu.memory_space<vmem>>, vector<2x1x208xf32>
    %130 = vector.shape_cast %129 : vector<2x1x208xf32> to vector<2x208xf32>
    %131 = vector.shape_cast %128 : vector<2x208xf32> to vector<2x1x208xf32>
    tpu.vector_store %arg3[%c0_69, %c3_70, %c0_71], %131 {strides = array<i32>} : memref<2x4x208xf32, #tpu.memory_space<vmem>>, vector<2x1x208xf32>,
    %132 = vector.extract_strided_slice %128 {offsets = [0, 0], sizes = [2, 171], strides = [1, 1]} : vector<2x208xf32> to vector<2x171xf32>
    %133 = vector.extract_strided_slice %128 {offsets = [0, 1], sizes = [2, 171], strides = [1, 1]} : vector<2x208xf32> to vector<2x171xf32>
    %134 = vector.extract_strided_slice %128 {offsets = [0, 16], sizes = [2, 171], strides = [1, 1]} : vector<2x208xf32> to vector<2x171xf32>
    %135 = vector.extract_strided_slice %128 {offsets = [0, 17], sizes = [2, 171], strides = [1, 1]} : vector<2x208xf32> to vector<2x171xf32>
    %136 = arith.maximumf %132, %133 : vector<2x171xf32>
    %137 = arith.maximumf %134, %135 : vector<2x171xf32>
    %138 = arith.maximumf %136, %137 : vector<2x171xf32>
    %c0_72 = arith.constant 0 : index
    %c3_73 = arith.constant 3 : index
    %c0_74 = arith.constant 0 : index
    %139 = vector.load %arg4[%c0_72, %c3_73, %c0_74] : memref<2x4x171xf32, #tpu.memory_space<vmem>>, vector<2x1x171xf32>
    %140 = vector.shape_cast %139 : vector<2x1x171xf32> to vector<2x171xf32>
    %141 = vector.shape_cast %138 : vector<2x171xf32> to vector<2x1x171xf32>
    tpu.vector_store %arg4[%c0_72, %c3_73, %c0_74], %141 {strides = array<i32>} : memref<2x4x171xf32, #tpu.memory_space<vmem>>, vector<2x1x171xf32>,
    return
  }
  func.func @transform_0(%arg0: i32) -> (i32, i32, i32) {
    %c0_i32 = arith.constant 0 : i32
    %c0_i32_0 = arith.constant 0 : i32
    %c0_i32_1 = arith.constant 0 : i32
    return %arg0, %c0_i32, %c0_i32_0 : i32, i32, i32
  }
  func.func @transform_1(%arg0: i32) -> (i32, i32, i32) {
    %c0_i32 = arith.constant 0 : i32
    %c0_i32_0 = arith.constant 0 : i32
    %c0_i32_1 = arith.constant 0 : i32
    return %arg0, %c0_i32, %c0_i32_0 : i32, i32, i32
  }
  func.func @transform_2(%arg0: i32) -> (i32, i32, i32) {
    %c0_i32 = arith.constant 0 : i32
    %c0_i32_0 = arith.constant 0 : i32
    %c0_i32_1 = arith.constant 0 : i32
    return %arg0, %c0_i32, %c0_i32_0 : i32, i32, i32
  }
  func.func @transform_3(%arg0: i32) -> (i32, i32, i32) {
    %c0_i32 = arith.constant 0 : i32
    %c0_i32_0 = arith.constant 0 : i32
    %c0_i32_1 = arith.constant 0 : i32
    return %arg0, %c0_i32, %c0_i32_0 : i32, i32, i32
  }
}

</mosaic_0001>

<llo_original>
// kernel: tpu_custom_call.1
$region0: #{tpu_custom_call.1}
  #allocation0 [shape = 'u32[]', space=smem, size = 0x4, offset = 0x4, fixed_abs, tag = 'smem constant byte address 0x4 - core index']
  #allocation1 [shape = 'u32[144,128]{1,0:T(1,128)}', space=vmem, size = 0x12000, scoped, tag = 'internal scratch']
  %s0 = inlined_call_operand.hbm [shape: f32[2,1,259], index: 0, kind: input, shape index: {}]
  %s1 = inlined_call_operand.hbm [shape: f32[2,4,208], index: 1, kind: output, shape index: {0}]
  %s2 = inlined_call_operand.hbm [shape: f32[2,4,208], index: 2, kind: output, shape index: {1}]
  %s3 = inlined_call_operand.hbm [shape: f32[2,4,171], index: 3, kind: output, shape index: {2}]
  %4 = xla_tuple %s1, %s2, %s3
  %s5 = sld [smem:[#allocation0]]
  $region34: #{tpu_custom_call.1} parent=0
    _
  %s7 = ssub.s32 1, %s5
  %s8 = scalar_select 0, %s7, %s5
  $region1: #{tpu_custom_call.1} parent=0
    #allocation2 [shape = 'u8[3072]{0}', space=vmem, size = 0xc00, scoped, tag = 'input window, operand 0, single buffered']
    #allocation3 [shape = 's32[1]{0}', space=sflag, size = 0x4, scoped, tag = 'scoped memory for tpu_custom_call.1']
    #allocation4 [shape = 's32[1]{0}', space=sflag, size = 0x4, scoped, tag = 'scoped memory for tpu_custom_call.1']
    #allocation5 [shape = 'u8[8192]{0}', space=vmem, size = 0x2000, scoped, tag = 'output window, operand 0, single buffered']
    #allocation6 [shape = 'u8[8192]{0}', space=vmem, size = 0x2000, scoped, tag = 'output window, operand 1, single buffered']
    #allocation7 [shape = 's32[1]{0}', space=sflag, size = 0x4, scoped, tag = 'scoped memory for tpu_custom_call.1']
    #allocation8 [shape = 'u8[8192]{0}', space=vmem, size = 0x2000, scoped, tag = 'output window, operand 2, single buffered']
    %9 = vsyncpa [#allocation3], 0
    %10 = vsyncpa [#allocation4], 0
    %11 = vsyncpa [#allocation7], 0
    // Predicated region
    $region2: #{tpu_custom_call.1} parent=1 // pred_check
      _
    $region3: #{tpu_custom_call.1} parent=1 // pred_check_branch
      %13 = sbr.rel (0) target = $region5
    $region4: #{tpu_custom_call.1} parent=1 // pred_region
      %s15 = ssub.s32 96, 96
      %16 = vsyncadd [#allocation3], %s15
      %s17 = sshll.u32 [#allocation2], 4
      %s18 = int_to_ptr.vmem [resolvable:$true] %s17
      %23 = dma.hbm_to_vmem [thread:$0]  %s0, 96, %s18, [#allocation3], 48, 48, 3
    $region5: #{tpu_custom_call.1} parent=1 // pred_fallthru
      _
    // Predicated region
    $region6: #{tpu_custom_call.1} parent=1 // pred_check
      _
    $region7: #{tpu_custom_call.1} parent=1 // pred_check_branch
      %25 = sbr.rel (0) target = $region9
    $region8: #{tpu_custom_call.1} parent=1 // pred_region
      %26 = dma.done [#allocation3], 96
    $region9: #{tpu_custom_call.1} parent=1 // pred_fallthru
      _
    %v27 = vld [vmem:[#allocation2] sm:$0x3]
    %v28 = vld [vmem:[#allocation2 + $0x3] sm:$0x3]
    %v29 = vsub.f32 0.0, %v27
    %v30 = vsub.f32 0.0, %v28
    %33 = vrot.lane.b32.xlu0 %v27, 127
    %v34 = vpop.permute.xlu0 %33
    %35 = vrot.lane.b32.xlu0 %v28, 127
    %v36 = vpop.permute.xlu0 %35
    %v37 = vrot.slane %v34, 1
    %v38 = vrot.slane %v36, 1
    %vm39 = vcmask 1039360
    %v40 = vsel %vm39, %v34, %v37
    %v41 = vsel %vm39, %v36, %v38
    %v44 = vsub.f32 %v29, %v40
    %v45 = vsub.f32 %v30, %v41
    %46 = vrot.lane.b32.xlu0 %v27, 126
    %v47 = vpop.permute.xlu0 %46
    %48 = vrot.lane.b32.xlu0 %v28, 126
    %v49 = vpop.permute.xlu0 %48
    %v50 = vrot.slane %v47, 1
    %v51 = vrot.slane %v49, 1
    %vm52 = vcmask 1031168
    %v53 = vsel %vm52, %v47, %v50
    %v54 = vsel %vm52, %v49, %v51
    %v57 = vadd.f32 %v44, %v53
    %v58 = vadd.f32 %v45, %v54
    %v59 = vsub.f32 %v44, %v53
    %v60 = vsub.f32 %v45, %v54
    %61 = vrot.lane.b32.xlu0 %v27, 125
    %v62 = vpop.permute.xlu0 %61
    %63 = vrot.lane.b32.xlu0 %v28, 125
    %v64 = vpop.permute.xlu0 %63
    %v65 = vrot.slane %v62, 1
    %v66 = vrot.slane %v64, 1
    %vm67 = vcmask 1022976
    %v68 = vsel %vm67, %v62, %v65
    %v69 = vsel %vm67, %v64, %v66
    %v72 = vadd.f32 %v57, %v68
    %v73 = vadd.f32 %v58, %v69
    %v74 = vsub.f32 %v59, %v68
    %v75 = vsub.f32 %v60, %v69
    %76 = vrot.lane.b32.xlu0 %v27, 112
    %v77 = vpop.permute.xlu0 %76
    %78 = vrot.lane.b32.xlu0 %v28, 112
    %v79 = vpop.permute.xlu0 %78
    %v80 = vrot.slane %v77, 1
    %v81 = vrot.slane %v79, 1
    %vm82 = vcmask 916480
    %v83 = vsel %vm82, %v77, %v80
    %v84 = vsel %vm82, %v79, %v81
    %v87 = vsub.f32 %v72, %v83
    %v88 = vsub.f32 %v73, %v84
    %v89 = vsub.f32 %v74, %v83
    %v90 = vsub.f32 %v75, %v84
    %91 = vrot.lane.b32.xlu0 %v27, 111
    %v92 = vpop.permute.xlu0 %91
    %93 = vrot.lane.b32.xlu0 %v28, 111
    %v94 = vpop.permute.xlu0 %93
    %v95 = vrot.slane %v92, 1
    %v96 = vrot.slane %v94, 1
    %vm97 = vcmask 908288
    %v98 = vsel %vm97, %v92, %v95
    %v99 = vsel %vm97, %v94, %v96
    %v102 = vsub.f32 %v87, %v98
    %v103 = vsub.f32 %v88, %v99
    %v104 = vsub.f32 %v89, %v98
    %v105 = vsub.f32 %v90, %v99
    %106 = vrot.lane.b32.xlu0 %v27, 110
    %v107 = vpop.permute.xlu0 %106
    %108 = vrot.lane.b32.xlu0 %v28, 110
    %v109 = vpop.permute.xlu0 %108
    %v110 = vrot.slane %v107, 1
    %v111 = vrot.slane %v109, 1
    %vm112 = vcmask 900096
    %v113 = vsel %vm112, %v107, %v110
    %v114 = vsel %vm112, %v109, %v111
    %v117 = vadd.f32 %v102, %v113
    %v118 = vadd.f32 %v103, %v114
    %v119 = vsub.f32 %v104, %v113
    %v120 = vsub.f32 %v105, %v114
    %121 = vrot.lane.b32.xlu0 %v27, 109
    %v122 = vpop.permute.xlu0 %121
    %123 = vrot.lane.b32.xlu0 %v28, 109
    %v124 = vpop.permute.xlu0 %123
    %v125 = vrot.slane %v122, 1
    %v126 = vrot.slane %v124, 1
    %vm127 = vcmask 891904
    %v128 = vsel %vm127, %v122, %v125
    %v129 = vsel %vm127, %v124, %v126
    %v132 = vadd.f32 %v117, %v128
    %v133 = vadd.f32 %v118, %v129
    %v134 = vsub.f32 %v119, %v128
    %v135 = vsub.f32 %v120, %v129
    %136 = vrot.lane.b32.xlu0 %v27, 96
    %v137 = vpop.permute.xlu0 %136
    %138 = vrot.lane.b32.xlu0 %v28, 96
    %v139 = vpop.permute.xlu0 %138
    %v140 = vrot.slane %v137, 1
    %v141 = vrot.slane %v139, 1
    %vm142 = vcmask 785408
    %v143 = vsel %vm142, %v137, %v140
    %v144 = vsel %vm142, %v139, %v141
    %v147 = vsub.f32 %v132, %v143
    %v148 = vsub.f32 %v133, %v144
    %v149 = vadd.f32 %v134, %v143
    %v150 = vadd.f32 %v135, %v144
    %151 = vrot.lane.b32.xlu0 %v27, 95
    %v152 = vpop.permute.xlu0 %151
    %153 = vrot.lane.b32.xlu0 %v28, 95
    %v154 = vpop.permute.xlu0 %153
    %v155 = vrot.slane %v152, 1
    %v156 = vrot.slane %v154, 1
    %vm157 = vcmask 777216
    %v158 = vsel %vm157, %v152, %v155
    %v159 = vsel %vm157, %v154, %v156
    %v162 = vsub.f32 %v147, %v158
    %v163 = vsub.f32 %v148, %v159
    %v164 = vadd.f32 %v149, %v158
    %v165 = vadd.f32 %v150, %v159
    %166 = vrot.lane.b32.xlu0 %v27, 94
    %v167 = vpop.permute.xlu0 %166
    %168 = vrot.lane.b32.xlu0 %v28, 94
    %v169 = vpop.permute.xlu0 %168
    %v170 = vrot.slane %v167, 1
    %v171 = vrot.slane %v169, 1
    %vm172 = vcmask 769024
    %v173 = vsel %vm172, %v167, %v170
    %v174 = vsel %vm172, %v169, %v171
    %v177 = vadd.f32 %v162, %v173
    %v178 = vadd.f32 %v163, %v174
    %v179 = vadd.f32 %v164, %v173
    %v180 = vadd.f32 %v165, %v174
    %181 = vrot.lane.b32.xlu0 %v27, 93
    %v182 = vpop.permute.xlu0 %181
    %183 = vrot.lane.b32.xlu0 %v28, 93
    %v184 = vpop.permute.xlu0 %183
    %v185 = vrot.slane %v182, 1
    %v186 = vrot.slane %v184, 1
    %vm187 = vcmask 760832
    %v188 = vsel %vm187, %v182, %v185
    %v189 = vsel %vm187, %v184, %v186
    %v192 = vadd.f32 %v177, %v188
    %v193 = vadd.f32 %v178, %v189
    %v194 = vadd.f32 %v179, %v188
    %v195 = vadd.f32 %v180, %v189
    %196 = vrot.lane.b32.xlu0 %v27, 80
    %v197 = vpop.permute.xlu0 %196
    %198 = vrot.lane.b32.xlu0 %v28, 80
    %v199 = vpop.permute.xlu0 %198
    %v200 = vrot.slane %v197, 1
    %v201 = vrot.slane %v199, 1
    %vm202 = vcmask 654336
    %v203 = vsel %vm202, %v197, %v200
    %v204 = vsel %vm202, %v199, %v201
    %v207 = vsub.f32 %v192, %v203
    %v208 = vsub.f32 %v193, %v204
    %v209 = vadd.f32 %v194, %v203
    %v210 = vadd.f32 %v195, %v204
    %v211 = vld [vmem:[#allocation2] sm:$0x7]
    %v212 = vld [vmem:[#allocation2 + $0x3] sm:$0x7]
    %215 = vrot.lane.b32.xlu0 %v211, 79
    %v216 = vpop.permute.xlu0 %215
    %217 = vrot.lane.b32.xlu0 %v212, 79
    %v218 = vpop.permute.xlu0 %217
    %v219 = vrot.slane %v216, 1
    %v220 = vrot.slane %v218, 1
    %vm221 = vcmask 646144
    %v222 = vsel %vm221, %v216, %v219
    %v223 = vsel %vm221, %v218, %v220
    %v226 = vsub.f32 %v207, %v222
    %v227 = vsub.f32 %v208, %v223
    %v228 = vadd.f32 %v209, %v222
    %v229 = vadd.f32 %v210, %v223
    %230 = vrot.lane.b32.xlu0 %v211, 78
    %v231 = vpop.permute.xlu0 %230
    %232 = vrot.lane.b32.xlu0 %v212, 78
    %v233 = vpop.permute.xlu0 %232
    %v234 = vrot.slane %v231, 1
    %v235 = vrot.slane %v233, 1
    %vm236 = vcmask 637952
    %v237 = vsel %vm236, %v231, %v234
    %v238 = vsel %vm236, %v233, %v235
    %v241 = vadd.f32 %v226, %v237
    %v242 = vadd.f32 %v227, %v238
    %v243 = vadd.f32 %v228, %v237
    %v244 = vadd.f32 %v229, %v238
    %245 = vrot.lane.b32.xlu0 %v211, 77
    %v246 = vpop.permute.xlu0 %245
    %247 = vrot.lane.b32.xlu0 %v212, 77
    %v248 = vpop.permute.xlu0 %247
    %v249 = vrot.slane %v246, 1
    %v250 = vrot.slane %v248, 1
    %vm251 = vcmask 629760
    %v252 = vsel %vm251, %v246, %v249
    %v253 = vsel %vm251, %v248, %v250
    %v256 = vadd.f32 %v241, %v252
    %v257 = vadd.f32 %v242, %v253
    %v258 = vadd.f32 %v243, %v252
    %v259 = vadd.f32 %v244, %v253
    %v260 = vlaneseq
    %vm261 = vcmp.ge.s32.totalorder %v260, 0
    %vm262 = vcmp.lt.s32.totalorder %v260, 208
    %vm263 = vmand %vm261, %vm262
    %264 = vst.msk [vmem:[#allocation5] ss:$4 sm:$0x3] %vm263, %v256
    %s265 = scalar_lea.vmem [#allocation5], 8
    %266 = vst.msk [vmem:[%s265] ss:$4 sm:$0x3] %vm263, %v257
    %v267 = vmax.f32 %v256, 0.0
    %v268 = vmax.f32 %v257, 0.0
    %269 = vst.msk [vmem:[#allocation6] ss:$4 sm:$0x3] %vm263, %v267
    %s270 = scalar_lea.vmem [#allocation6], 8
    %271 = vst.msk [vmem:[%s270] ss:$4 sm:$0x3] %vm263, %v268
    %274 = vrot.lane.b32.xlu0 %v267, 127
    %v275 = vpop.permute.xlu0 %274
    %276 = vrot.lane.b32.xlu0 %v268, 127
    %v277 = vpop.permute.xlu0 %276
    %v278 = vrot.slane %v275, 1
    %v279 = vrot.slane %v277, 1
    %v280 = vsel %vm39, %v275, %v278
    %v281 = vsel %vm39, %v277, %v279
    %v284 = vmax.f32 %v267, %v280
    %v285 = vmax.f32 %v268, %v281
    %288 = vrot.lane.b32.xlu0 %v284, 112
    %v289 = vpop.permute.xlu0 %288
    %290 = vrot.lane.b32.xlu0 %v285, 112
    %v291 = vpop.permute.xlu0 %290
    %v292 = vrot.slane %v289, 1
    %v293 = vrot.slane %v291, 1
    %v294 = vsel %vm82, %v289, %v292
    %v295 = vsel %vm82, %v291, %v293
    %v298 = vmax.f32 %v284, %v294
    %v299 = vmax.f32 %v285, %v295
    %vm300 = vcmp.lt.s32.totalorder %v260, 171
    %vm301 = vmand %vm261, %vm300
    %302 = vst.msk [vmem:[#allocation8] ss:$4 sm:$0x3] %vm301, %v298
    %s303 = scalar_lea.vmem [#allocation8], 8
    %304 = vst.msk [vmem:[%s303] ss:$4 sm:$0x3] %vm301, %v299
    %v305 = vsub.f32 0.0, %v256
    %v306 = vsub.f32 0.0, %v257
    %s307 = scalar_lea.vmem [#allocation5], 1
    %308 = vst.msk [vmem:[%s307] ss:$4 sm:$0x3] %vm263, %v305
    %s309 = scalar_lea.vmem [#allocation5], 9
    %310 = vst.msk [vmem:[%s309] ss:$4 sm:$0x3] %vm263, %v306
    %v311 = vmax.f32 %v305, 0.0
    %v312 = vmax.f32 %v306, 0.0
    %s313 = scalar_lea.vmem [#allocation6], 1
    %314 = vst.msk [vmem:[%s313] ss:$4 sm:$0x3] %vm263, %v311
    %s315 = scalar_lea.vmem [#allocation6], 9
    %316 = vst.msk [vmem:[%s315] ss:$4 sm:$0x3] %vm263, %v312
    %319 = vrot.lane.b32.xlu0 %v311, 127
    %v320 = vpop.permute.xlu0 %319
    %321 = vrot.lane.b32.xlu0 %v312, 127
    %v322 = vpop.permute.xlu0 %321
    %v323 = vrot.slane %v320, 1
    %v324 = vrot.slane %v322, 1
    %v325 = vsel %vm39, %v320, %v323
    %v326 = vsel %vm39, %v322, %v324
    %v329 = vmax.f32 %v311, %v325
    %v330 = vmax.f32 %v312, %v326
    %333 = vrot.lane.b32.xlu0 %v329, 112
    %v334 = vpop.permute.xlu0 %333
    %335 = vrot.lane.b32.xlu0 %v330, 112
    %v336 = vpop.permute.xlu0 %335
    %v337 = vrot.slane %v334, 1
    %v338 = vrot.slane %v336, 1
    %v339 = vsel %vm82, %v334, %v337
    %v340 = vsel %vm82, %v336, %v338
    %v343 = vmax.f32 %v329, %v339
    %v344 = vmax.f32 %v330, %v340
    %s345 = scalar_lea.vmem [#allocation8], 1
    %346 = vst.msk [vmem:[%s345] ss:$4 sm:$0x3] %vm301, %v343
    %s347 = scalar_lea.vmem [#allocation8], 9
    %348 = vst.msk [vmem:[%s347] ss:$4 sm:$0x3] %vm301, %v344
    %s349 = scalar_lea.vmem [#allocation5], 2
    %350 = vst.msk [vmem:[%s349] ss:$4 sm:$0x3] %vm263, %v258
    %s351 = scalar_lea.vmem [#allocation5], 10
    %352 = vst.msk [vmem:[%s351] ss:$4 sm:$0x3] %vm263, %v259
    %v353 = vmax.f32 %v258, 0.0
    %v354 = vmax.f32 %v259, 0.0
    %s355 = scalar_lea.vmem [#allocation6], 2
    %356 = vst.msk [vmem:[%s355] ss:$4 sm:$0x3] %vm263, %v353
    %s357 = scalar_lea.vmem [#allocation6], 10
    %358 = vst.msk [vmem:[%s357] ss:$4 sm:$0x3] %vm263, %v354
    %361 = vrot.lane.b32.xlu0 %v353, 127
    %v362 = vpop.permute.xlu0 %361
    %363 = vrot.lane.b32.xlu0 %v354, 127
    %v364 = vpop.permute.xlu0 %363
    %v365 = vrot.slane %v362, 1
    %v366 = vrot.slane %v364, 1
    %v367 = vsel %vm39, %v362, %v365
    %v368 = vsel %vm39, %v364, %v366
    %v371 = vmax.f32 %v353, %v367
    %v372 = vmax.f32 %v354, %v368
    %375 = vrot.lane.b32.xlu0 %v371, 112
    %v376 = vpop.permute.xlu0 %375
    %377 = vrot.lane.b32.xlu0 %v372, 112
    %v378 = vpop.permute.xlu0 %377
    %v379 = vrot.slane %v376, 1
    %v380 = vrot.slane %v378, 1
    %v381 = vsel %vm82, %v376, %v379
    %v382 = vsel %vm82, %v378, %v380
    %v385 = vmax.f32 %v371, %v381
    %v386 = vmax.f32 %v372, %v382
    %s387 = scalar_lea.vmem [#allocation8], 2
    %388 = vst.msk [vmem:[%s387] ss:$4 sm:$0x3] %vm301, %v385
    %s389 = scalar_lea.vmem [#allocation8], 10
    %390 = vst.msk [vmem:[%s389] ss:$4 sm:$0x3] %vm301, %v386
    %v391 = vsub.f32 0.0, %v258
    %v392 = vsub.f32 0.0, %v259
    %s393 = scalar_lea.vmem [#allocation5], 3
    %394 = vst.msk [vmem:[%s393] ss:$4 sm:$0x3] %vm263, %v391
    %s395 = scalar_lea.vmem [#allocation5], 11
    %396 = vst.msk [vmem:[%s395] ss:$4 sm:$0x3] %vm263, %v392
    %v397 = vmax.f32 %v391, 0.0
    %v398 = vmax.f32 %v392, 0.0
    %s399 = scalar_lea.vmem [#allocation6], 3
    %400 = vst.msk [vmem:[%s399] ss:$4 sm:$0x3] %vm263, %v397
    %s401 = scalar_lea.vmem [#allocation6], 11
    %402 = vst.msk [vmem:[%s401] ss:$4 sm:$0x3] %vm263, %v398
    %405 = vrot.lane.b32.xlu0 %v397, 127
    %v406 = vpop.permute.xlu0 %405
    %407 = vrot.lane.b32.xlu0 %v398, 127
    %v408 = vpop.permute.xlu0 %407
    %v409 = vrot.slane %v406, 1
    %v410 = vrot.slane %v408, 1
    %v411 = vsel %vm39, %v406, %v409
    %v412 = vsel %vm39, %v408, %v410
    %v415 = vmax.f32 %v397, %v411
    %v416 = vmax.f32 %v398, %v412
    %419 = vrot.lane.b32.xlu0 %v415, 112
    %v420 = vpop.permute.xlu0 %419
    %421 = vrot.lane.b32.xlu0 %v416, 112
    %v422 = vpop.permute.xlu0 %421
    %v423 = vrot.slane %v420, 1
    %v424 = vrot.slane %v422, 1
    %v425 = vsel %vm82, %v420, %v423
    %v426 = vsel %vm82, %v422, %v424
    %v429 = vmax.f32 %v415, %v425
    %v430 = vmax.f32 %v416, %v426
    %s431 = scalar_lea.vmem [#allocation8], 3
    %432 = vst.msk [vmem:[%s431] ss:$4 sm:$0x3] %vm301, %v429
    %s433 = scalar_lea.vmem [#allocation8], 11
    %434 = vst.msk [vmem:[%s433] ss:$4 sm:$0x3] %vm301, %v430
    // Predicated region
    $region10: #{tpu_custom_call.1} parent=1 // pred_check
      _
    $region11: #{tpu_custom_call.1} parent=1 // pred_check_branch
      %436 = sbr.rel (0) target = $region13
    $region12: #{tpu_custom_call.1} parent=1 // pred_region
      %s438 = ssub.s32 256, 256
      %439 = vsyncadd [#allocation4], %s438
      %s440 = sshll.u32 [#allocation5], 4
      %s441 = int_to_ptr.vmem [resolvable:$true] %s440
      %446 = dma.vmem_to_hbm [thread:$0]  %s441, 256, %s1, [#allocation4], 128, 128, 8
    $region13: #{tpu_custom_call.1} parent=1 // pred_fallthru
      _
    // Predicated region
    $region14: #{tpu_custom_call.1} parent=1 // pred_check
      _
    $region15: #{tpu_custom_call.1} parent=1 // pred_check_branch
      %448 = sbr.rel (0) target = $region17
    $region16: #{tpu_custom_call.1} parent=1 // pred_region
      %s450 = ssub.s32 256, 256
      %451 = vsyncadd [#allocation7], %s450
      %s452 = sshll.u32 [#allocation6], 4
      %s453 = int_to_ptr.vmem [resolvable:$true] %s452
      %458 = dma.vmem_to_hbm [thread:$0]  %s453, 256, %s2, [#allocation7], 128, 128, 8
    $region17: #{tpu_custom_call.1} parent=1 // pred_fallthru
      _
    // Predicated region
    $region18: #{tpu_custom_call.1} parent=1 // pred_check
      _
    $region19: #{tpu_custom_call.1} parent=1 // pred_check_branch
      %460 = sbr.rel (0) target = $region21
    $region20: #{tpu_custom_call.1} parent=1 // pred_region
      %s462 = ssub.s32 256, 256
      %463 = vsyncadd [#allocation7], %s462
      %s464 = sshll.u32 [#allocation8], 4
      %s465 = int_to_ptr.vmem [resolvable:$true] %s464
      %470 = dma.vmem_to_hbm [thread:$0]  %s465, 256, %s3, [#allocation7], 128, 128, 8
    $region21: #{tpu_custom_call.1} parent=1 // pred_fallthru
      _
    // Predicated region
    $region22: #{tpu_custom_call.1} parent=1 // pred_check
      _
    $region23: #{tpu_custom_call.1} parent=1 // pred_check_branch
      %472 = sbr.rel (0) target = $region25
    $region24: #{tpu_custom_call.1} parent=1 // pred_region
      %473 = dma.done [#allocation4], 256
    $region25: #{tpu_custom_call.1} parent=1 // pred_fallthru
      _
    // Predicated region
    $region26: #{tpu_custom_call.1} parent=1 // pred_check
      _
    $region27: #{tpu_custom_call.1} parent=1 // pred_check_branch
      %475 = sbr.rel (0) target = $region29
    $region28: #{tpu_custom_call.1} parent=1 // pred_region
      %476 = dma.done [#allocation7], 256
    $region29: #{tpu_custom_call.1} parent=1 // pred_fallthru
      _
    // Predicated region
    $region30: #{tpu_custom_call.1} parent=1 // pred_check
      _
    $region31: #{tpu_custom_call.1} parent=1 // pred_check_branch
      %478 = sbr.rel (0) target = $region33
    $region32: #{tpu_custom_call.1} parent=1 // pred_region
      %479 = dma.done [#allocation7], 256
    $region33: #{tpu_custom_call.1} parent=1 // pred_fallthru
      _
    %480 = vsyncpa [#allocation3], 1
    %481 = vsyncpa [#allocation4], 1
    %482 = vsyncpa [#allocation7], 1

</llo_original>
